<compile_context>
chip_gen: v5e
topology: v5e:2x2
jax: 0.10.0
libtpu: 0.0.40
codegen_flags: <defaults>
</compile_context>

<pallas_src>
import functools

import jax
import jax.numpy as jnp
from jax.experimental import pallas as pl
from jax.experimental.pallas import tpu as pltpu


def _round_up(v: int, m: int) -> int:
    return -(-v // m) * m


def _cdiv(a: int, b: int) -> int:
    return -(-a // b)


# ---------------------------------------------------------------------------
# Kernel bodies
# ---------------------------------------------------------------------------

def _tile_sum_f32(x_ref, k_logical, *, ts, sp, mask_tail):
    """Sum the (TB, TS, Cp) tile over the S axis in f32, masking any padded tail."""
    x = x_ref[...]
    if mask_tail:  # static Python condition
        pos = k_logical * ts + jax.lax.broadcasted_iota(jnp.int32, x.shape, 1)
        x = jnp.where(pos < sp, x, 0)
    # dtype=f32 lets the reduction carry the wide accumulator instead of first
    # materializing a widened copy of the whole tile.
    return jnp.sum(x, axis=1, dtype=jnp.float32)


def _meanpool_kernel(x_ref, o_ref, acc_ref, *, inv_s, g, c_in, ts, sp, mask_tail):
    """No-reduce path: mean over `size` only."""
    k = pl.program_id(1)

    @pl.when(k == 0)
    def _():
        acc_ref[...] = jnp.zeros_like(acc_ref)

    acc_ref[...] += _tile_sum_f32(x_ref, k, ts=ts, sp=sp, mask_tail=mask_tail)

    @pl.when(k == pl.num_programs(1) - 1)
    def _():
        total = acc_ref[...]                          # (TB, g*c_in) f32
        red = total[:, :c_in]
        for j in range(1, g):                         # collapse lane-packed groups
            red = red + total[:, j * c_in:(j + 1) * c_in]
        o_ref[...] = (red * inv_s).astype(o_ref.dtype)


def _meanpool_reduce_kernel(x_ref, w_ref, b_ref, o_ref, acc_ref, *,
                            inv_s, ts, sp, mask_tail):
    """Reduce path: Linear-then-mean == mean-then-Linear (exact by linearity).

    The weight arrives already g-tiled to (g*C_in, C_out), so the MXU matmul also
    collapses the lane-packed groups."""
    k = pl.program_id(1)

    @pl.when(k == 0)
    def _():
        acc_ref[...] = jnp.zeros_like(acc_ref)

    acc_ref[...] += _tile_sum_f32(x_ref, k, ts=ts, sp=sp, mask_tail=mask_tail)

    @pl.when(k == pl.num_programs(1) - 1)
    def _():
        mean_packed = acc_ref[...] * inv_s            # (TB, g*C_in) f32
        y = jnp.dot(mean_packed, w_ref[...], preferred_element_type=jnp.float32)
        o_ref[...] = (y + b_ref[...]).astype(o_ref.dtype)


def _partial_sum_kernel(x_ref, o_ref, *, ts, sp, nk_half, mask_tail):
    """Small-batch megacore path: each core (leading 'parallel' axis) produces an
    f32 partial sum over its half of the S tiles, accumulated directly into the
    (already f32) output block -- no scratch needed."""
    c = pl.program_id(0)
    k = pl.program_id(1)

    @pl.when(k == 0)
    def _():
        o_ref[...] = jnp.zeros_like(o_ref)

    o_ref[...] += _tile_sum_f32(x_ref, c * nk_half + k, ts=ts, sp=sp,
                                mask_tail=mask_tail)


# ---------------------------------------------------------------------------
# Tiling / wrapper
# ---------------------------------------------------------------------------

def _pick_seq_tile(sp, tb, row_bytes, budget):
    """Largest S tile (multiple of 8, or full Sp) fitting `budget` bytes.

    Returns (ts, mask_tail)."""
    ts_cap = budget // max(1, tb * row_bytes)
    ts_cap = max(8, (ts_cap // 8) * 8)
    if sp <= ts_cap:
        return sp, False
    for t in range(ts_cap, 7, -8):          # prefer an exact divisor: no masking
        if sp % t == 0:
            return t, False
    return ts_cap, True                     # awkward S: mask the padded tail


_DEFAULT_X_TILE_BUDGET = 6 * 1024 * 1024    # per x buffer; x2 double-buffer <= 12 MiB


def mean_pool(x, weight=None, bias=None, *,
              x_tile_budget_bytes=_DEFAULT_X_TILE_BUDGET):
    """MeanPool forward.

    x: (B, S, C_in).  If `weight` (C_in, C_out) is given (optional `bias` (C_out,)),
    applies the Linear then means over S; else just means over S.  Computed as
    mean-then-Linear, which is exactly equivalent by linearity.
    """
    B, S, C_in = x.shape
    out_dtype = x.dtype
    itemsize = x.dtype.itemsize
    inv_s = 1.0 / float(S)

    # ---- lane packing: fold g steps of S into lanes so g*C_in fills <= 128 lanes.
    g = 1
    if C_in < 128:
        for cand in range(128 // C_in, 0, -1):
            if S % cand == 0:
                g = cand
                break
    sp, cp = S // g, g * C_in
    xp = x.reshape(B, sp, cp)                      # contiguous => free, no copy

    # ---- VMEM-budget-aware tile sizes (grow TS before TB).
    row_bytes = _round_up(cp, 128) * itemsize      # lane-padded bytes per (row, s)
    tb = B if B <= 8 else 8
    ts, mask_tail = _pick_seq_tile(sp, tb, row_bytes, x_tile_budget_bytes)
    if ts == sp and B > tb:
        # Whole S fits in one buffer -> grow the batch tile within the same budget.
        tb_cap = x_tile_budget_bytes // max(1, _round_up(sp, 8) * row_bytes)
        if tb_cap >= B:
            tb = B
        elif tb_cap >= 16:
            tb = (tb_cap // 8) * 8                 # multiple of 8 (output sublanes)

    nb = _cdiv(B, tb)
    nk = _cdiv(sp, ts)

    # ---- small-batch megacore: split the S reduction across two cores.
    use_core_split = (nb == 1) and (nk >= 2)
    nk_half = _cdiv(nk, 2) if use_core_split else nk
    needs_mask = mask_tail or (use_core_split and (2 * nk_half * ts != sp))

    # ---- scoped-VMEM limit from the actual footprint (+headroom), capped for v7x.
    x_tile_bytes = tb * _round_up(max(ts, 8), 8) * _round_up(cp, 128) * itemsize
    f32_tile_bytes = tb * _round_up(max(ts, 8), 8) * _round_up(cp, 128) * 4
    need = 2 * x_tile_bytes                        # double-buffered x
    need += f32_tile_bytes                         # widen / select temporaries
    need += 3 * tb * _round_up(cp, 128) * 4        # accumulator + output buffers
    if needs_mask:
        need += f32_tile_bytes                     # iota temporary
    if weight is not None:
        c_out = weight.shape[-1]
        need += 2 * (_round_up(cp, 8) * _round_up(c_out, 128)
                     + _round_up(c_out, 128)) * 4
    vmem_limit = int(min(max(int(need * 1.4) + (2 << 20), 32 << 20), 64 << 20))

    cost = pl.CostEstimate(flops=B * sp * cp, transcendentals=0,
                           bytes_accessed=xp.size * itemsize + B * cp * 4)

    if use_core_split:
        # Two f32 partial-sum slabs (one per core), combined by a tiny wrapper op.
        partial = pl.pallas_call(
            functools.partial(_partial_sum_kernel, ts=ts, sp=sp,
                              nk_half=nk_half, mask_tail=needs_mask),
            out_shape=jax.ShapeDtypeStruct((2, B, cp), jnp.float32),
            grid_spec=pltpu.PrefetchScalarGridSpec(
                num_scalar_prefetch=0,
                grid=(2, nk_half),
                in_specs=[pl.BlockSpec(
                    (tb, ts, cp),
                    # Clamp so an odd tile count never indexes past the last block;
                    # the mask zeroes any duplicated / padded rows.
                    lambda c, k: (0, jnp.minimum(c * nk_half + k, nk - 1), 0))],
                out_specs=pl.BlockSpec((None, tb, cp), lambda c, k: (c, 0, 0)),
            ),
            compiler_params=pltpu.CompilerParams(
                dimension_semantics=("parallel", "arbitrary"),
                vmem_limit_bytes=vmem_limit),
            cost_estimate=cost,
        )(xp)
        total = partial[0] + partial[1]                      # (B, cp) f32
        if g > 1:
            total = total.reshape(B, g, C_in).sum(axis=1)    # collapse lane groups
        mean = total * inv_s
        if weight is None:
            return mean.astype(out_dtype)
        y = mean @ weight.astype(jnp.float32)
        if bias is not None:
            y = y + bias.astype(jnp.float32)
        return y.astype(out_dtype)

    grid = (nb, nk)
    dim_sem = ("parallel", "arbitrary")

    if weight is not None:
        c_out = weight.shape[-1]
        # g-tile the weight so the matmul also collapses the lane-packed groups.
        w_packed = (jnp.tile(weight, (g, 1)) if g > 1 else weight).astype(jnp.float32)
        b2d = (bias.astype(jnp.float32).reshape(1, c_out) if bias is not None
               else jnp.zeros((1, c_out), jnp.float32))
        return pl.pallas_call(
            functools.partial(_meanpool_reduce_kernel, inv_s=inv_s, ts=ts, sp=sp,
                              mask_tail=mask_tail),
            out_shape=jax.ShapeDtypeStruct((B, c_out), out_dtype),
            grid_spec=pltpu.PrefetchScalarGridSpec(
                num_scalar_prefetch=0,
                grid=grid,
                in_specs=[
                    pl.BlockSpec((tb, ts, cp), lambda i, k: (i, k, 0)),
                    pl.BlockSpec((cp, c_out), lambda i, k: (0, 0)),
                    pl.BlockSpec((1, c_out), lambda i, k: (0, 0)),
                ],
                out_specs=pl.BlockSpec((tb, c_out), lambda i, k: (i, 0)),
                scratch_shapes=[pltpu.VMEM((tb, cp), jnp.float32)],
            ),
            compiler_params=pltpu.CompilerParams(
                dimension_semantics=dim_sem, vmem_limit_bytes=vmem_limit),
            cost_estimate=cost,
        )(xp, w_packed, b2d)

    return pl.pallas_call(
        functools.partial(_meanpool_kernel, inv_s=inv_s, g=g, c_in=C_in, ts=ts,
                          sp=sp, mask_tail=mask_tail),
        out_shape=jax.ShapeDtypeStruct((B, C_in), out_dtype),
        grid_spec=pltpu.PrefetchScalarGridSpec(
            num_scalar_prefetch=0,
            grid=grid,
            in_specs=[pl.BlockSpec((tb, ts, cp), lambda i, k: (i, k, 0))],
            out_specs=pl.BlockSpec((tb, C_in), lambda i, k: (i, 0)),
            scratch_shapes=[pltpu.VMEM((tb, cp), jnp.float32)],
        ),
        compiler_params=pltpu.CompilerParams(
            dimension_semantics=dim_sem, vmem_limit_bytes=vmem_limit),
        cost_estimate=cost,
    )(xp)


if __name__ == "__main__":
    key = jax.random.PRNGKey(0)
    k1, k2, k3, k4, k5, k6 = jax.random.split(key, 6)

    # --- Test 1: module-spec shapes, with the `reduce` Linear -----------------
    B, S, C_IN, C_OUT = 2, 8, 32, 16
    x = jax.random.normal(k1, (B, S, C_IN), dtype=jnp.float32)
    bound = 1.0 / jnp.sqrt(jnp.float32(C_IN))
    weight = jax.random.uniform(k2, (C_IN, C_OUT), jnp.float32, -bound, bound)
    bias = jax.random.uniform(k3, (C_OUT,), jnp.float32, -bound, bound)

    out = mean_pool(x, weight, bias)
    jax.block_until_ready(out)
    ref = jnp.mean(x @ weight + bias, axis=1)
    assert out.shape == (B, C_OUT)
    assert jnp.allclose(out, ref, atol=1e-5, rtol=1e-5)

    # --- Test 2: no reduce layer (plain mean over size) -----------------------
    out2 = mean_pool(x)
    jax.block_until_ready(out2)
    assert out2.shape == (B, C_IN)
    assert jnp.allclose(out2, jnp.mean(x, axis=1), atol=1e-5, rtol=1e-5)

    # --- Test 3: tiny tile budget -> multiple S tiles, tail masking and the
    #     small-batch two-core split path (with the reduce Linear) -------------
    B3, S3 = 2, 56
    x3 = jax.random.normal(k4, (B3, S3, C_IN), dtype=jnp.float32)
    out3 = mean_pool(x3, weight, bias, x_tile_budget_bytes=6000)
    jax.block_until_ready(out3)
    ref3 = jnp.mean(x3 @ weight + bias, axis=1)
    assert jnp.allclose(out3, ref3, atol=1e-5, rtol=1e-5)

    # --- Test 4: batch that does not divide the batch tile (standard path) ----
    B4, S4 = 10, 24
    x4 = jax.random.normal(k5, (B4, S4, C_IN), dtype=jnp.float32)
    out4 = mean_pool(x4, x_tile_budget_bytes=9000)
    jax.block_until_ready(out4)
    assert jnp.allclose(out4, jnp.mean(x4, axis=1), atol=1e-5, rtol=1e-5)

    # --- Test 5: channel >= 128 (no lane packing, g == 1) ---------------------
    x5 = jax.random.normal(k6, (2, 8, 128), dtype=jnp.float32)
    out5 = mean_pool(x5)
    jax.block_until_ready(out5)
    assert jnp.allclose(out5, jnp.mean(x5, axis=1), atol=1e-5, rtol=1e-5)

    print("KERNEL_OK")
</pallas_src>

<mosaic_0001>
module attributes {stable_mosaic.version = 11 : i64} {
  func.func @_meanpool_reduce_kernel(%arg0: i32, %arg1: i32, %arg2: memref<2x2x128xf32, #tpu.memory_space<vmem>>, %arg3: memref<128x16xf32, #tpu.memory_space<vmem>>, %arg4: memref<1x16xf32, #tpu.memory_space<vmem>>, %arg5: memref<2x16xf32, #tpu.memory_space<vmem>>, %arg6: memref<2x128xf32, #tpu.memory_space<vmem>>) attributes {dimension_semantics = [#tpu.dimension_semantics<parallel>, #tpu.dimension_semantics<arbitrary>], iteration_bounds = array<i64: 1, 1>, scalar_prefetch = 0 : i64, scratch_operands = 1 : i64, tpu.core_type = #tpu.core_type<tc>, window_params = [{transform_indices = @transform_0, window_bounds = array<i64: 2, 2, 128>}, {pipeline_mode = #tpu.pipeline_mode<synchronous>, transform_indices = @transform_1, window_bounds = array<i64: 128, 16>}, {pipeline_mode = #tpu.pipeline_mode<synchronous>, transform_indices = @transform_2, window_bounds = array<i64: 1, 16>}, {transform_indices = @transform_3, window_bounds = array<i64: 2, 16>}]} {
    %c0_i32 = arith.constant 0 : i32
    %0 = arith.cmpi eq, %arg1, %c0_i32 : i32
    %1 = arith.extui %0 : i1 to i32
    %c0_i32_0 = arith.constant 0 : i32
    %2 = arith.cmpi ne, %1, %c0_i32_0 : i32
    scf.if %2 {
      %cst_9 = arith.constant 0.000000e+00 : f32
      %11 = vector.broadcast %cst_9 : f32 to vector<2x128xf32>
      %c0_10 = arith.constant 0 : index
      %c0_11 = arith.constant 0 : index
      %12 = vector.load %arg6[%c0_10, %c0_11] : memref<2x128xf32, #tpu.memory_space<vmem>>, vector<2x128xf32>
      tpu.vector_store %arg6[%c0_10, %c0_11], %11 {strides = array<i32>} : memref<2x128xf32, #tpu.memory_space<vmem>>, vector<2x128xf32>,
    } else {
    }
    %c0 = arith.constant 0 : index
    %c0_1 = arith.constant 0 : index
    %3 = vector.load %arg6[%c0, %c0_1] : memref<2x128xf32, #tpu.memory_space<vmem>>, vector<2x128xf32>
    %c0_2 = arith.constant 0 : index
    %c0_3 = arith.constant 0 : index
    %c0_4 = arith.constant 0 : index
    %4 = vector.load %arg2[%c0_2, %c0_3, %c0_4] : memref<2x2x128xf32, #tpu.memory_space<vmem>>, vector<2x2x128xf32>
    %cst = arith.constant dense<0.000000e+00> : vector<2x128xf32>
    %5 = vector.multi_reduction <add>, %4, %cst [1] : vector<2x2x128xf32> to vector<2x128xf32>
    %6 = arith.addf %3, %5 : vector<2x128xf32>
    %c0_5 = arith.constant 0 : index
    %c0_6 = arith.constant 0 : index
    %7 = vector.load %arg6[%c0_5, %c0_6] : memref<2x128xf32, #tpu.memory_space<vmem>>, vector<2x128xf32>
    tpu.vector_store %arg6[%c0_5, %c0_6], %6 {strides = array<i32>} : memref<2x128xf32, #tpu.memory_space<vmem>>, vector<2x128xf32>,
    %c0_i32_7 = arith.constant 0 : i32
    %8 = arith.cmpi eq, %arg1, %c0_i32_7 : i32
    %9 = arith.extui %8 : i1 to i32
    %c0_i32_8 = arith.constant 0 : i32
    %10 = arith.cmpi ne, %9, %c0_i32_8 : i32
    scf.if %10 {
      %c0_9 = arith.constant 0 : index
      %c0_10 = arith.constant 0 : index
      %11 = vector.load %arg6[%c0_9, %c0_10] : memref<2x128xf32, #tpu.memory_space<vmem>>, vector<2x128xf32>
      %cst_11 = arith.constant 1.250000e-01 : f32
      %12 = vector.broadcast %cst_11 : f32 to vector<2x128xf32>
      %13 = arith.mulf %11, %12 : vector<2x128xf32>
      %c0_12 = arith.constant 0 : index
      %c0_13 = arith.constant 0 : index
      %14 = vector.load %arg3[%c0_12, %c0_13] : memref<128x16xf32, #tpu.memory_space<vmem>>, vector<128x16xf32>
      %cst_14 = arith.constant dense<0.000000e+00> : vector<2x16xf32>
      %15 = tpu.matmul %13, %14, %cst_14 {dimension_numbers = #tpu.dot_dimension_numbers<[1], [0], [0], [1], [0, 0, 1, 1], [], []>} : vector<2x128xf32>, vector<128x16xf32>, vector<2x16xf32> -> vector<2x16xf32>
      %c0_15 = arith.constant 0 : index
      %c0_16 = arith.constant 0 : index
      %16 = vector.load %arg4[%c0_15, %c0_16] : memref<1x16xf32, #tpu.memory_space<vmem>>, vector<1x16xf32>
      %17 = vector.broadcast %16 : vector<1x16xf32> to vector<2x16xf32>
      %18 = arith.addf %15, %17 : vector<2x16xf32>
      %c0_17 = arith.constant 0 : index
      %c0_18 = arith.constant 0 : index
      %19 = vector.load %arg5[%c0_17, %c0_18] : memref<2x16xf32, #tpu.memory_space<vmem>>, vector<2x16xf32>
      tpu.vector_store %arg5[%c0_17, %c0_18], %18 {strides = array<i32>} : memref<2x16xf32, #tpu.memory_space<vmem>>, vector<2x16xf32>,
    } else {
    }
    return
  }
  func.func @transform_0(%arg0: i32, %arg1: i32) -> (i32, i32, i32) {
    %c0_i32 = arith.constant 0 : i32
    %c0_i32_0 = arith.constant 0 : i32
    return %arg0, %arg1, %c0_i32 : i32, i32, i32
  }
  func.func @transform_1(%arg0: i32, %arg1: i32) -> (i32, i32) {
    %c0_i32 = arith.constant 0 : i32
    %c0_i32_0 = arith.constant 0 : i32
    %c0_i32_1 = arith.constant 0 : i32
    return %c0_i32, %c0_i32_0 : i32, i32
  }
  func.func @transform_2(%arg0: i32, %arg1: i32) -> (i32, i32) {
    %c0_i32 = arith.constant 0 : i32
    %c0_i32_0 = arith.constant 0 : i32
    %c0_i32_1 = arith.constant 0 : i32
    return %c0_i32, %c0_i32_0 : i32, i32
  }
  func.func @transform_3(%arg0: i32, %arg1: i32) -> (i32, i32) {
    %c0_i32 = arith.constant 0 : i32
    %c0_i32_0 = arith.constant 0 : i32
    return %arg0, %c0_i32 : i32, i32
  }
}

</mosaic_0001>

<llo_original>
// kernel: tpu_custom_call.1
$region0: #{tpu_custom_call.1}
  #allocation0 [shape = 'u32[]', space=smem, size = 0x4, offset = 0x4, fixed_abs, tag = 'smem constant byte address 0x4 - core index']
  #allocation1 [shape = 'u32[72,128]{1,0:T(1,128)}', space=vmem, size = 0x9000, scoped, tag = 'internal scratch']
  #allocation2 [shape = 'f32[2,128]{1,0:T(2,128)}', space=vmem, size = 0x400, scoped, tag = 'scratch operand']
  %s0 = inlined_call_operand.vmem [shape: f32[2,2,128], index: 0, kind: input, shape index: {}]
  %s1 = inlined_call_operand.vmem [shape: f32[128,16], index: 1, kind: input, shape index: {}]
  %s2 = inlined_call_operand.vmem [shape: f32[1,16], index: 2, kind: input, shape index: {}]
  %s3 = inlined_call_operand.hbm [shape: f32[2,16], index: 3, kind: output, shape index: {}]
  %s4 = sld [smem:[#allocation0]]
  $region30: #{tpu_custom_call.1} parent=0
    _
  %s6 = ssub.s32 1, %s4
  %s7 = scalar_select 0, %s6, %s4
  $region1: #{tpu_custom_call.1} parent=0
    #allocation3 [shape = 'u8[1024]{0}', space=vmem, size = 0x400, scoped, tag = 'output window, operand 0, single buffered']
    #allocation4 [shape = 's32[1]{0}', space=sflag, size = 0x4, scoped, tag = 'scoped memory for tpu_custom_call.1']
    %8 = vsyncpa [#allocation4], 0
    // Predicated region
    $region2: #{tpu_custom_call.1} parent=1 // pred_check
      _
    $region3: #{tpu_custom_call.1} parent=1 // pred_check_branch
      %10 = sbr.rel (0) target = $region5
    $region4: #{tpu_custom_call.1} parent=1 // pred_region
      _
    $region5: #{tpu_custom_call.1} parent=1 // pred_fallthru
      _
    // Predicated region
    $region6: #{tpu_custom_call.1} parent=1 // pred_check
      _
    $region7: #{tpu_custom_call.1} parent=1 // pred_check_branch
      %12 = sbr.rel (0) target = $region9
    $region8: #{tpu_custom_call.1} parent=1 // pred_region
      _
    $region9: #{tpu_custom_call.1} parent=1 // pred_fallthru
      _
    // Predicated region
    $region10: #{tpu_custom_call.1} parent=1 // pred_check
      _
    $region11: #{tpu_custom_call.1} parent=1 // pred_check_branch
      %14 = sbr.rel (0) target = $region13
    $region12: #{tpu_custom_call.1} parent=1 // pred_region
      _
    $region13: #{tpu_custom_call.1} parent=1 // pred_fallthru
      _
    %p15 = scmp.eq.s32.totalorder 0, 0
    // Predicated region
    $region14: #{tpu_custom_call.1} parent=1 // pred_check
      %p16 = pneg %p15
    $region15: #{tpu_custom_call.1} parent=1 // pred_check_branch
      %18 = sbr.rel (%p16) target = $region17
    $region16: #{tpu_custom_call.1} parent=1 // pred_region
      %19 = vst [vmem:[#allocation2] sm:$0x3] 0.0
    $region17: #{tpu_custom_call.1} parent=1 // pred_fallthru
      _
    %v20 = vld [vmem:[#allocation2] sm:$0x3]
    %v21 = vld [vmem:[%s0] sm:$0x3]
    %v22 = vld [vmem:[%s0 + $0x2] sm:$0x3]
    %vm23 = vcmask 1041408
    %v24 = vsel %vm23, %v21, 0.0
    %v25 = vrot.slane %v24, 4
    %v26 = vadd.f32 %v24, %v25
    %v27 = vrot.slane %v26, 2
    %v28 = vadd.f32 %v26, %v27
    %v29 = vrot.slane %v28, 1
    %v30 = vadd.f32 %v28, %v29
    %v31 = vsel %vm23, %v22, 0.0
    %v32 = vrot.slane %v31, 4
    %v33 = vadd.f32 %v31, %v32
    %v34 = vrot.slane %v33, 2
    %v35 = vadd.f32 %v33, %v34
    %v36 = vrot.slane %v35, 1
    %v37 = vadd.f32 %v35, %v36
    %vm40 = vcmask 1041409
    %v41 = vsel %vm40, %v37, %v30
    %v43 = vadd.f32 %v20, %v41
    %44 = vst [vmem:[#allocation2] sm:$0x3] %v43
    // Predicated region
    $region18: #{tpu_custom_call.1} parent=1 // pred_check
      %p45 = pneg %p15
    $region19: #{tpu_custom_call.1} parent=1 // pred_check_branch
      %47 = sbr.rel (%p45) target = $region21
    $region20: #{tpu_custom_call.1} parent=1 // pred_region
      %v48 = vld [vmem:[#allocation2] sm:$0x3]
      %v49 = vmul.f32 %v48, 0.125
      %v50 = vld [vmem:[%s1] sm:$0xff]
      %v51 = vld [vmem:[%s1 + $0x8] sm:$0xff]
      %v52 = vld [vmem:[%s1 + $0x10] sm:$0xff]
      %v53 = vld [vmem:[%s1 + $0x18] sm:$0xff]
      %v54 = vld [vmem:[%s1 + $0x20] sm:$0xff]
      %v55 = vld [vmem:[%s1 + $0x28] sm:$0xff]
      %v56 = vld [vmem:[%s1 + $0x30] sm:$0xff]
      %v57 = vld [vmem:[%s1 + $0x38] sm:$0xff]
      %v58 = vld [vmem:[%s1 + $0x40] sm:$0xff]
      %v59 = vld [vmem:[%s1 + $0x48] sm:$0xff]
      %v60 = vld [vmem:[%s1 + $0x50] sm:$0xff]
      %v61 = vld [vmem:[%s1 + $0x58] sm:$0xff]
      %v62 = vld [vmem:[%s1 + $0x60] sm:$0xff]
      %v63 = vld [vmem:[%s1 + $0x68] sm:$0xff]
      %v64 = vld [vmem:[%s1 + $0x70] sm:$0xff]
      %v65 = vld [vmem:[%s1 + $0x78] sm:$0xff]
      %v66 = vld [vmem:[%s2] sm:$0x1]
      %v68 = vperm.slane %v66, 0
      %70 = vmatpush.msra.mxu0 %v65
      %71 = vmatpush.msra.mxu0 %v64
      %72 = vmatpush.msra.mxu0 %v63
      %73 = vmatpush.msra.mxu0 %v62
      %74 = vmatpush.msra.mxu0 %v61
      %75 = vmatpush.msra.mxu0 %v60
      %76 = vmatpush.msra.mxu0 %v59
      %77 = vmatpush.msra.mxu0 %v58
      %78 = vmatpush.msra.mxu0 %v57
      %79 = vmatpush.msra.mxu0 %v56
      %80 = vmatpush.msra.mxu0 %v55
      %81 = vmatpush.msra.mxu0 %v54
      %82 = vmatpush.msra.mxu0 %v53
      %83 = vmatpush.msra.mxu0 %v52
      %84 = vmatpush.msra.mxu0 %v51
      %85 = vmatpush.msra.mxu0 %v50
      %86 = vmatmul.f32.gmra.mxu0 %v49
      %v87 = vpop.f32.mrf.mxu0
      %v88 = vadd.f32 %v68, %v87
      %89 = vdwg.mxu0
      %vm90 = vcmask 123904
      %91 = vst.msk [vmem:[#allocation3] sm:$0x3] %vm90, %v88
    $region21: #{tpu_custom_call.1} parent=1 // pred_fallthru
      _
    // Predicated region
    $region22: #{tpu_custom_call.1} parent=1 // pred_check
      _
    $region23: #{tpu_custom_call.1} parent=1 // pred_check_branch
      %93 = sbr.rel (0) target = $region25
    $region24: #{tpu_custom_call.1} parent=1 // pred_region
      %95 = vsyncadd [#allocation4], 0
      %s97 = sshll.u32 [#allocation3], 4
      %s98 = int_to_ptr.vmem [resolvable:$true] %s97
      %s99 = sshll.u32 %s3, 4
      %s100 = int_to_ptr.hbm [resolvable:$true] %s99
      %102 = dma.vmem_to_hbm [thread:$0]  %s98, 32, %s100, [#allocation4]
    $region25: #{tpu_custom_call.1} parent=1 // pred_fallthru
      _
    // Predicated region
    $region26: #{tpu_custom_call.1} parent=1 // pred_check
      _
    $region27: #{tpu_custom_call.1} parent=1 // pred_check_branch
      %104 = sbr.rel (0) target = $region29
    $region28: #{tpu_custom_call.1} parent=1 // pred_region
      %106 = dma.done [#allocation4], 32
    $region29: #{tpu_custom_call.1} parent=1 // pred_fallthru
      _
    %107 = vsyncpa [#allocation4], 1

</llo_original>
